<compile_context>
chip_gen: v7x
topology: tpu7x:2x2x1
jax: 0.10.0
libtpu: 0.0.40
codegen_flags: <defaults>
</compile_context>

<pallas_src>
import math

import jax
import jax.numpy as jnp
from jax.experimental import pallas as pl
from jax.experimental.pallas import tpu as pltpu

H_PAD = 128  # hidden dim padded to one full lane width


def _round_up(x, m):
    return ((x + m - 1) // m) * m


def _tpu_generation():
    """Best-effort TPU generation sniff; conservative default."""
    try:
        kind = jax.devices()[0].device_kind.lower()
    except Exception:  # pragma: no cover
        return "other"
    if "v7" in kind:
        return "v7x"
    if "v6" in kind:
        return "v6e"
    if "v5" in kind:
        return "v5e"
    return "other"


def _lrelu(v):
    return jnp.where(v >= 0, v, 0.01 * v)


# ------------------------------- kernel -------------------------------------

def _mdp_kernel(mf_ref, w1_ref, b1_ref, w2_ref, b2_ref, w3_ref, b3_ref, out_ref):
    """One mf row-tile: 2 bf16 MXU matmuls (f32 acc), bias/LeakyReLU in the
    epilogue dtype (bf16 on v6e/v7x, f32 on v5e), final H->1 layer as a VPU
    multiply + f32 cross-lane reduce (keeps the MXU free of a 1-lane result)."""
    cdt = b1_ref.dtype  # epilogue compute dtype, baked into the prepared params

    x = mf_ref[...].astype(jnp.bfloat16)
    h1 = jnp.dot(x, w1_ref[...], preferred_element_type=jnp.float32)
    h1 = _lrelu(h1.astype(cdt) + b1_ref[...])
    h2 = jnp.dot(h1.astype(jnp.bfloat16), w2_ref[...], preferred_element_type=jnp.float32)
    h2 = _lrelu(h2.astype(cdt) + b2_ref[...])
    # Padded lanes of h2 and w3 are zero, so the 128-lane reduction is exact.
    val = jnp.sum((h2 * w3_ref[...]).astype(jnp.float32), axis=-1, keepdims=True)
    out_ref[...] = (val + b3_ref[...]).astype(out_ref.dtype)


def _dense_forward(x2d, params_padded):
    """Plain-jnp forward with the padded/bf16 params (policy row & small-M path)."""
    w1, b1, w2, b2, w3, b3 = params_padded
    h1 = _lrelu(jnp.dot(x2d.astype(jnp.bfloat16), w1,
                        preferred_element_type=jnp.float32) + b1.astype(jnp.float32))
    h2 = _lrelu(jnp.dot(h1.astype(jnp.bfloat16), w2,
                        preferred_element_type=jnp.float32) + b2.astype(jnp.float32))
    return jnp.sum(h2 * w3.astype(jnp.float32), axis=-1, keepdims=True) + b3


# ------------------------------- wrapper -------------------------------------

def reward_mdp_forward(policy_input, mf_input, params_padded, *,
                       tile_rows=None, force_kernel=False):
    """value = RewardMDPModel(policy_input, mf_input); returns (1 + M, 1) f32."""
    pol = policy_input.reshape(1, -1)       # (1, D) -- reshape only, no concat
    mf = mf_input                           # (M, D) -- keep caller dtype (bf16 halves DMA)
    M, D = mf.shape
    assert pol.shape[1] == D, "policy_input.numel() must equal mf_input feature dim"

    w1, b1, w2, b2, w3, b3 = params_padded
    gen = _tpu_generation()

    # Policy row: one row, computed once in the wrapper (XLA fuses it); keeps the
    # kernel free of duplicated per-step 1-row matmuls.
    pol_val = _dense_forward(pol, params_padded)                       # (1, 1) f32

    # Small-batch fast path: for tiny M the pallas_call is pure fixed overhead.
    if not force_kernel and M * (D * H_PAD + H_PAD * H_PAD) < (1 << 20):
        mf_vals = _dense_forward(mf, params_padded)
        return jnp.concatenate([pol_val, mf_vals], axis=0).astype(jnp.float32)

    # ---- tile selection (multiple of 16 sublanes for the bf16 LHS) ----
    if tile_rows is None:
        tile_cap = 512 if gen == "v5e" else 1024
    else:
        tile_cap = max(16, _round_up(int(tile_rows), 16))
    target = _round_up(max(M, 1), 16)
    if gen == "v7x":
        # Keep nb >= 2 when M is large so both TensorCores get at least one step.
        target = min(target, max(16, _round_up(pl.cdiv(M, 2), 16)))
    tile = max(16, min(tile_cap, target))
    nb = pl.cdiv(M, tile)

    flops = 2 * nb * tile * (D * H_PAD + H_PAD * H_PAD + H_PAD)
    bytes_accessed = (mf.size * mf.dtype.itemsize
                      + (w1.size + w2.size) * 2
                      + (b1.size + b2.size + w3.size) * b1.dtype.itemsize
                      + b3.size * 4
                      + M * 4)

    def resident(shape):
        # whole (small) array as one block; same block index for every grid step
        return pl.BlockSpec(shape, lambda i: (0, 0))

    mf_vals = pl.pallas_call(
        _mdp_kernel,
        out_shape=jax.ShapeDtypeStruct((M, 1), jnp.float32),
        grid=(nb,),
        in_specs=[
            pl.BlockSpec((tile, D), lambda i: (i, 0)),   # mf row-block (pipelined)
            resident(w1.shape), resident(b1.shape),
            resident(w2.shape), resident(b2.shape),
            resident(w3.shape), resident(b3.shape),
        ],
        out_specs=pl.BlockSpec((tile, 1), lambda i: (i, 0)),
        compiler_params=pltpu.CompilerParams(
            dimension_semantics=("parallel",)),
        cost_estimate=pl.CostEstimate(flops=int(flops), transcendentals=0,
                                      bytes_accessed=int(bytes_accessed)),
    )(mf, w1, b1, w2, b2, w3, b3)

    # Tiny output-side concat ((1+M) floats); the D-wide input concat is fused away.
    return jnp.concatenate([pol_val, mf_vals], axis=0)


# ----------------------------- parameters ------------------------------------

def _xavier_uniform(key, fan_in, fan_out, gain):
    """nn.init.xavier_uniform_ equivalent, stored as (fan_in, fan_out) = W.T."""
    bound = gain * math.sqrt(6.0 / (fan_in + fan_out))
    return jax.random.uniform(key, (fan_in, fan_out), jnp.float32, -bound, bound)


def init_params(key, in_dim, num_of_units):
    """Raw (unpadded, f32) params matching RewardMDPModel.reset_parameters()."""
    H = num_of_units
    gain = math.sqrt(2.0 / (1.0 + 0.01 ** 2))  # calculate_gain('leaky_relu'), slope 0.01
    keys = jax.random.split(key, 6)

    def bias(k, fan_in, fan_out):
        # nn.Linear default bias init: U(-1/sqrt(fan_in), 1/sqrt(fan_in))
        b = 1.0 / math.sqrt(fan_in)
        return jax.random.uniform(k, (1, fan_out), jnp.float32, -b, b)

    w1 = _xavier_uniform(keys[0], in_dim, H, gain); b1 = bias(keys[1], in_dim, H)
    w2 = _xavier_uniform(keys[2], H, H, gain);      b2 = bias(keys[3], H, H)
    w3 = _xavier_uniform(keys[4], H, 1, gain);      b3 = bias(keys[5], H, 1)
    return (w1, b1, w2, b2, w3, b3)


def prepare_params(raw_params, *, epilogue_dtype=jnp.float32):
    """One-time prep: zero-pad hidden dim to 128 lanes, cast matmul weights to bf16
    (f32 MXU accumulation in-kernel), store biases / final H->1 row in the epilogue
    dtype (bf16 on v6e/v7x, f32 on v5e)."""
    w1, b1, w2, b2, w3, b3 = raw_params
    D, H = w1.shape
    w1p = jnp.zeros((D, H_PAD), jnp.float32).at[:, :H].set(w1).astype(jnp.bfloat16)
    b1p = jnp.zeros((1, H_PAD), jnp.float32).at[0, :H].set(b1[0]).astype(epilogue_dtype)
    w2p = jnp.zeros((H_PAD, H_PAD), jnp.float32).at[:H, :H].set(w2).astype(jnp.bfloat16)
    b2p = jnp.zeros((1, H_PAD), jnp.float32).at[0, :H].set(b2[0]).astype(epilogue_dtype)
    w3p = jnp.zeros((1, H_PAD), jnp.float32).at[0, :H].set(w3[:, 0]).astype(epilogue_dtype)
    b3p = b3.reshape(1, 1).astype(jnp.float32)
    return (w1p, b1p, w2p, b2p, w3p, b3p)


def reference_forward(policy_input, mf_input, raw_params):
    """Pure-JAX f32 reference matching the PyTorch forward exactly."""
    w1, b1, w2, b2, w3, b3 = raw_params
    x = jnp.concatenate([policy_input.reshape(1, -1), mf_input], axis=0).astype(jnp.float32)
    h1 = _lrelu(x @ w1 + b1)
    h2 = _lrelu(h1 @ w2 + b2)
    return h2 @ w3 + b3


if __name__ == "__main__":
    state_shape, action_shape, mf_shape, num_of_units = 4, 3, 4, 32
    D = state_shape * action_shape + mf_shape   # 16 = feature dim of the concatenated input
    M = 7                                       # mf_input rows (exercises a partial row tile)

    key = jax.random.PRNGKey(0)
    k_p, k_pol, k_mf = jax.random.split(key, 3)
    raw_params = init_params(k_p, D, num_of_units)

    epi_dt = jnp.bfloat16 if _tpu_generation() in ("v6e", "v7x") else jnp.float32
    params = prepare_params(raw_params, epilogue_dtype=epi_dt)

    # policy_input.reshape(1, -1) must have D columns for torch.cat(dim=0) to be valid.
    policy_input = jax.random.normal(k_pol, (D,), jnp.float32)
    mf_input = jax.random.normal(k_mf, (M, D), jnp.float32)

    ref = reference_forward(policy_input, mf_input, raw_params)

    # Pallas path (forced, since M is tiny and would otherwise take the fast path).
    out = reward_mdp_forward(policy_input, mf_input, params, force_kernel=True)
    out = jax.block_until_ready(out)
    assert out.shape == (1 + M, 1)
    assert jnp.allclose(out, ref, atol=5e-2, rtol=5e-2), \
        f"kernel max abs diff {float(jnp.max(jnp.abs(out - ref)))}"

    # Small-batch fast path must agree too.
    out_fast = jax.block_until_ready(reward_mdp_forward(policy_input, mf_input, params))
    assert jnp.allclose(out_fast, ref, atol=5e-2, rtol=5e-2), \
        f"fast-path max abs diff {float(jnp.max(jnp.abs(out_fast - ref)))}"

    print("KERNEL_OK")
</pallas_src>

<mosaic_0001>
module attributes {stable_mosaic.version = 11 : i64} {
  func.func @_mdp_kernel(%arg0: i32, %arg1: memref<16x16xf32, #tpu.memory_space<vmem>>, %arg2: memref<16x128xbf16, #tpu.memory_space<vmem>>, %arg3: memref<1x128xf32, #tpu.memory_space<vmem>>, %arg4: memref<128x128xbf16, #tpu.memory_space<vmem>>, %arg5: memref<1x128xf32, #tpu.memory_space<vmem>>, %arg6: memref<1x128xf32, #tpu.memory_space<vmem>>, %arg7: memref<1x1xf32, #tpu.memory_space<vmem>>, %arg8: memref<16x1xf32, #tpu.memory_space<vmem>>) attributes {dimension_semantics = [#tpu.dimension_semantics<parallel>], iteration_bounds = array<i64: 1>, scalar_prefetch = 0 : i64, scratch_operands = 0 : i64, tpu.core_type = #tpu.core_type<tc>, window_params = [{transform_indices = @transform_0, window_bounds = array<i64: 16, 16>}, {pipeline_mode = #tpu.pipeline_mode<synchronous>, transform_indices = @transform_1, window_bounds = array<i64: 16, 128>}, {pipeline_mode = #tpu.pipeline_mode<synchronous>, transform_indices = @transform_2, window_bounds = array<i64: 1, 128>}, {pipeline_mode = #tpu.pipeline_mode<synchronous>, transform_indices = @transform_3, window_bounds = array<i64: 128, 128>}, {pipeline_mode = #tpu.pipeline_mode<synchronous>, transform_indices = @transform_4, window_bounds = array<i64: 1, 128>}, {pipeline_mode = #tpu.pipeline_mode<synchronous>, transform_indices = @transform_5, window_bounds = array<i64: 1, 128>}, {pipeline_mode = #tpu.pipeline_mode<synchronous>, transform_indices = @transform_6, window_bounds = array<i64: 1, 1>}, {transform_indices = @transform_7, window_bounds = array<i64: 16, 1>}]} {
    %c0 = arith.constant 0 : index
    %c0_0 = arith.constant 0 : index
    %0 = vector.load %arg1[%c0, %c0_0] : memref<16x16xf32, #tpu.memory_space<vmem>>, vector<16x16xf32>
    %1 = arith.truncf %0 : vector<16x16xf32> to vector<16x16xbf16>
    %c0_1 = arith.constant 0 : index
    %c0_2 = arith.constant 0 : index
    %2 = vector.load %arg2[%c0_1, %c0_2] : memref<16x128xbf16, #tpu.memory_space<vmem>>, vector<16x128xbf16>
    %cst = arith.constant dense<0.000000e+00> : vector<16x128xf32>
    %3 = tpu.matmul %1, %2, %cst {dimension_numbers = #tpu.dot_dimension_numbers<[1], [0], [0], [1], [0, 0, 1, 1], [], []>} : vector<16x16xbf16>, vector<16x128xbf16>, vector<16x128xf32> -> vector<16x128xf32>
    %c0_3 = arith.constant 0 : index
    %c0_4 = arith.constant 0 : index
    %4 = vector.load %arg3[%c0_3, %c0_4] : memref<1x128xf32, #tpu.memory_space<vmem>>, vector<1x128xf32>
    %5 = vector.broadcast %4 : vector<1x128xf32> to vector<16x128xf32>
    %6 = arith.addf %3, %5 : vector<16x128xf32>
    %cst_5 = arith.constant 0.000000e+00 : f32
    %7 = vector.broadcast %cst_5 : f32 to vector<16x128xf32>
    %8 = arith.cmpf oge, %6, %7 : vector<16x128xf32>
    %cst_6 = arith.constant 0.00999999977 : f32
    %9 = vector.broadcast %cst_6 : f32 to vector<16x128xf32>
    %10 = arith.mulf %9, %6 : vector<16x128xf32>
    %11 = arith.select %8, %6, %10 : vector<16x128xi1>, vector<16x128xf32>
    %12 = arith.truncf %11 : vector<16x128xf32> to vector<16x128xbf16>
    %c0_7 = arith.constant 0 : index
    %c0_8 = arith.constant 0 : index
    %13 = vector.load %arg4[%c0_7, %c0_8] : memref<128x128xbf16, #tpu.memory_space<vmem>>, vector<128x128xbf16>
    %cst_9 = arith.constant dense<0.000000e+00> : vector<16x128xf32>
    %14 = tpu.matmul %12, %13, %cst_9 {dimension_numbers = #tpu.dot_dimension_numbers<[1], [0], [0], [1], [0, 0, 1, 1], [], []>} : vector<16x128xbf16>, vector<128x128xbf16>, vector<16x128xf32> -> vector<16x128xf32>
    %c0_10 = arith.constant 0 : index
    %c0_11 = arith.constant 0 : index
    %15 = vector.load %arg5[%c0_10, %c0_11] : memref<1x128xf32, #tpu.memory_space<vmem>>, vector<1x128xf32>
    %16 = vector.broadcast %15 : vector<1x128xf32> to vector<16x128xf32>
    %17 = arith.addf %14, %16 : vector<16x128xf32>
    %cst_12 = arith.constant 0.000000e+00 : f32
    %18 = vector.broadcast %cst_12 : f32 to vector<16x128xf32>
    %19 = arith.cmpf oge, %17, %18 : vector<16x128xf32>
    %cst_13 = arith.constant 0.00999999977 : f32
    %20 = vector.broadcast %cst_13 : f32 to vector<16x128xf32>
    %21 = arith.mulf %20, %17 : vector<16x128xf32>
    %22 = arith.select %19, %17, %21 : vector<16x128xi1>, vector<16x128xf32>
    %c0_14 = arith.constant 0 : index
    %c0_15 = arith.constant 0 : index
    %23 = vector.load %arg6[%c0_14, %c0_15] : memref<1x128xf32, #tpu.memory_space<vmem>>, vector<1x128xf32>
    %24 = vector.broadcast %23 : vector<1x128xf32> to vector<16x128xf32>
    %25 = arith.mulf %22, %24 : vector<16x128xf32>
    %cst_16 = arith.constant dense<0.000000e+00> : vector<16xf32>
    %26 = vector.multi_reduction <add>, %25, %cst_16 [1] : vector<16x128xf32> to vector<16xf32>
    %27 = vector.shape_cast %26 : vector<16xf32> to vector<16x1xf32>
    %c0_17 = arith.constant 0 : index
    %c0_18 = arith.constant 0 : index
    %28 = vector.load %arg7[%c0_17, %c0_18] : memref<1x1xf32, #tpu.memory_space<vmem>>, vector<1x1xf32>
    %29 = vector.broadcast %28 : vector<1x1xf32> to vector<16x1xf32>
    %30 = arith.addf %27, %29 : vector<16x1xf32>
    %c0_19 = arith.constant 0 : index
    %c0_20 = arith.constant 0 : index
    %31 = vector.load %arg8[%c0_19, %c0_20] : memref<16x1xf32, #tpu.memory_space<vmem>>, vector<16x1xf32>
    tpu.vector_store %arg8[%c0_19, %c0_20], %30 {strides = array<i32>} : memref<16x1xf32, #tpu.memory_space<vmem>>, vector<16x1xf32>,
    return
  }
  func.func @transform_0(%arg0: i32) -> (i32, i32) {
    %c0_i32 = arith.constant 0 : i32
    %c0_i32_0 = arith.constant 0 : i32
    return %arg0, %c0_i32 : i32, i32
  }
  func.func @transform_1(%arg0: i32) -> (i32, i32) {
    %c0_i32 = arith.constant 0 : i32
    %c0_i32_0 = arith.constant 0 : i32
    %c0_i32_1 = arith.constant 0 : i32
    return %c0_i32, %c0_i32_0 : i32, i32
  }
  func.func @transform_2(%arg0: i32) -> (i32, i32) {
    %c0_i32 = arith.constant 0 : i32
    %c0_i32_0 = arith.constant 0 : i32
    %c0_i32_1 = arith.constant 0 : i32
    return %c0_i32, %c0_i32_0 : i32, i32
  }
  func.func @transform_3(%arg0: i32) -> (i32, i32) {
    %c0_i32 = arith.constant 0 : i32
    %c0_i32_0 = arith.constant 0 : i32
    %c0_i32_1 = arith.constant 0 : i32
    return %c0_i32, %c0_i32_0 : i32, i32
  }
  func.func @transform_4(%arg0: i32) -> (i32, i32) {
    %c0_i32 = arith.constant 0 : i32
    %c0_i32_0 = arith.constant 0 : i32
    %c0_i32_1 = arith.constant 0 : i32
    return %c0_i32, %c0_i32_0 : i32, i32
  }
  func.func @transform_5(%arg0: i32) -> (i32, i32) {
    %c0_i32 = arith.constant 0 : i32
    %c0_i32_0 = arith.constant 0 : i32
    %c0_i32_1 = arith.constant 0 : i32
    return %c0_i32, %c0_i32_0 : i32, i32
  }
  func.func @transform_6(%arg0: i32) -> (i32, i32) {
    %c0_i32 = arith.constant 0 : i32
    %c0_i32_0 = arith.constant 0 : i32
    %c0_i32_1 = arith.constant 0 : i32
    return %c0_i32, %c0_i32_0 : i32, i32
  }
  func.func @transform_7(%arg0: i32) -> (i32, i32) {
    %c0_i32 = arith.constant 0 : i32
    %c0_i32_0 = arith.constant 0 : i32
    return %arg0, %c0_i32 : i32, i32
  }
}

</mosaic_0001>

<llo_original>
// kernel: tpu_custom_call.1
$region0: #{tpu_custom_call.1}
  #allocation0 [shape = 'u32[]', space=smem, size = 0x4, offset = 0x4, fixed_abs, tag = 'smem constant byte address 0x4 - core index']
  #allocation1 [shape = 'u32[144,128]{1,0:T(1,128)}', space=vmem, size = 0x12000, scoped, tag = 'internal scratch']
  #allocation2 [shape = 'f32[1,1]{1,0:T(1,128)S(1)}', space=vmem, size = 0x200, scoped, tag = 'scoped memory for tpu_custom_call.1']
  %s0 = inlined_call_operand.hbm [shape: f32[7,16], index: 0, kind: input, shape index: {}]
  %s1 = inlined_call_operand.hbm [shape: bf16[16,128], index: 1, kind: input, shape index: {}]
  %s2 = inlined_call_operand.vmem [shape: f32[1,128], index: 2, kind: input, shape index: {}]
  %s3 = inlined_call_operand.hbm [shape: bf16[128,128], index: 3, kind: input, shape index: {}]
  %s4 = inlined_call_operand.vmem [shape: f32[1,128], index: 4, kind: input, shape index: {}]
  %s5 = inlined_call_operand.vmem [shape: f32[1,128], index: 5, kind: input, shape index: {}]
  %s6 = inlined_call_operand.<no memory space> [shape: f32[1,1], index: 6, kind: input, shape index: {}]
  %s7 = inlined_call_operand.vmem [shape: f32[7,1], index: 7, kind: output, shape index: {}]
  %s8 = sld [smem:[#allocation0]]
  $region84: #{tpu_custom_call.1} parent=0
    _
  %s10 = ssub.s32 1, %s8
  %s11 = scalar_select 0, %s10, %s8
  %v12 = vstv %s6
  %13 = vst [vmem:[#allocation2] sm:$0x1] %v12
  $region1: #{tpu_custom_call.1} parent=0
    #allocation3 [shape = 'u8[8192]{0}', space=vmem, size = 0x2000, scoped, tag = 'input window, operand 0, single buffered']
    #allocation4 [shape = 's32[1]{0}', space=sflag, size = 0x4, scoped, tag = 'scoped memory for tpu_custom_call.1']
    #allocation5 [shape = 'u8[4096]{0}', space=vmem, size = 0x1000, scoped, tag = 'input window, operand 1, single buffered']
    #allocation6 [shape = 's32[1]{0}', space=sflag, size = 0x4, scoped, tag = 'scoped memory for tpu_custom_call.1']
    #allocation7 [shape = 'u8[32768]{0}', space=vmem, size = 0x8000, scoped, tag = 'input window, operand 3, single buffered']
    #allocation8 [shape = 'u8[8192]{0}', space=vmem, size = 0x2000, scoped, tag = 'output window, operand 0, single buffered']
    %14 = vsyncpa [#allocation4], 0
    %15 = vsyncpa [#allocation6], 0
    // Predicated region
    $region2: #{tpu_custom_call.1} parent=1 // pred_check
      _
    $region3: #{tpu_custom_call.1} parent=1 // pred_check_branch
      %17 = sbr.rel (0) target = $region5
    $region4: #{tpu_custom_call.1} parent=1 // pred_region
      %s19 = ssub.s32 256, 128
      %20 = vsyncadd [#allocation4], %s19
      %s21 = sshll.u32 [#allocation3], 4
      %s22 = int_to_ptr.vmem [resolvable:$true] %s21
      %27 = dma.hbm_to_vmem [thread:$0]  %s0, 128, %s22, [#allocation4], 128, 128, 8
    $region5: #{tpu_custom_call.1} parent=1 // pred_fallthru
      _
    // Predicated region
    $region6: #{tpu_custom_call.1} parent=1 // pred_check
      _
    $region7: #{tpu_custom_call.1} parent=1 // pred_check_branch
      %29 = sbr.rel (0) target = $region9
    $region8: #{tpu_custom_call.1} parent=1 // pred_region
      %s31 = ssub.s32 128, 128
      %32 = vsyncadd [#allocation6], %s31
      %s33 = sshll.u32 [#allocation5], 4
      %s34 = int_to_ptr.vmem [resolvable:$true] %s33
      %39 = dma.hbm_to_vmem [thread:$0]  %s1, 128, %s34, [#allocation6], 64, 64, 4
    $region9: #{tpu_custom_call.1} parent=1 // pred_fallthru
      _
    // Predicated region
    $region10: #{tpu_custom_call.1} parent=1 // pred_check
      _
    $region11: #{tpu_custom_call.1} parent=1 // pred_check_branch
      %41 = sbr.rel (0) target = $region13
    $region12: #{tpu_custom_call.1} parent=1 // pred_region
      _
    $region13: #{tpu_custom_call.1} parent=1 // pred_fallthru
      _
    // Predicated region
    $region14: #{tpu_custom_call.1} parent=1 // pred_check
      _
    $region15: #{tpu_custom_call.1} parent=1 // pred_check_branch
      %43 = sbr.rel (0) target = $region17
    $region16: #{tpu_custom_call.1} parent=1 // pred_region
      %s45 = ssub.s32 1024, 1024
      %46 = vsyncadd [#allocation6], %s45
      %s47 = sshll.u32 [#allocation7], 4
      %s48 = int_to_ptr.vmem [resolvable:$true] %s47
      %53 = dma.hbm_to_vmem [thread:$0]  %s3, 1024, %s48, [#allocation6], 64, 64, 4
    $region17: #{tpu_custom_call.1} parent=1 // pred_fallthru
      _
    // Predicated region
    $region18: #{tpu_custom_call.1} parent=1 // pred_check
      _
    $region19: #{tpu_custom_call.1} parent=1 // pred_check_branch
      %55 = sbr.rel (0) target = $region21
    $region20: #{tpu_custom_call.1} parent=1 // pred_region
      _
    $region21: #{tpu_custom_call.1} parent=1 // pred_fallthru
      _
    // Predicated region
    $region22: #{tpu_custom_call.1} parent=1 // pred_check
      _
    $region23: #{tpu_custom_call.1} parent=1 // pred_check_branch
      %57 = sbr.rel (0) target = $region25
    $region24: #{tpu_custom_call.1} parent=1 // pred_region
      _
    $region25: #{tpu_custom_call.1} parent=1 // pred_fallthru
      _
    // Predicated region
    $region26: #{tpu_custom_call.1} parent=1 // pred_check
      _
    $region27: #{tpu_custom_call.1} parent=1 // pred_check_branch
      %59 = sbr.rel (0) target = $region29
    $region28: #{tpu_custom_call.1} parent=1 // pred_region
      _
    $region29: #{tpu_custom_call.1} parent=1 // pred_fallthru
      _
    // Predicated region
    $region30: #{tpu_custom_call.1} parent=1 // pred_check
      _
    $region31: #{tpu_custom_call.1} parent=1 // pred_check_branch
      %61 = sbr.rel (0) target = $region33
    $region32: #{tpu_custom_call.1} parent=1 // pred_region
      %62 = dma.done [#allocation4], 256
    $region33: #{tpu_custom_call.1} parent=1 // pred_fallthru
      _
    // Predicated region
    $region34: #{tpu_custom_call.1} parent=1 // pred_check
      _
    $region35: #{tpu_custom_call.1} parent=1 // pred_check_branch
      %64 = sbr.rel (0) target = $region37
    $region36: #{tpu_custom_call.1} parent=1 // pred_region
      %65 = dma.done [#allocation6], 128
    $region37: #{tpu_custom_call.1} parent=1 // pred_fallthru
      _
    // Predicated region
    $region38: #{tpu_custom_call.1} parent=1 // pred_check
      _
    $region39: #{tpu_custom_call.1} parent=1 // pred_check_branch
      %67 = sbr.rel (0) target = $region41
    $region40: #{tpu_custom_call.1} parent=1 // pred_region
      %68 = dma.done [#allocation6], 1024
    $region41: #{tpu_custom_call.1} parent=1 // pred_fallthru
      _
    %v70 = vld [vmem:[#allocation3] sm:$0xff]
    %v71 = vld [vmem:[#allocation3 + $0x8] sm:$0xff]
    %v72 = vpack.c.bf16 %v71, %v70
    %v73 = vld [vmem:[#allocation5] sm:$0xf]
    %v74 = vld [vmem:[#allocation5 + $0x4] sm:$0xf]
    %v75 = vld [vmem:[%s2] sm:$0x1]
    %v77 = vlaneseq
    %v78 = vshrl.u32 %v77, 7
    %v79 = vsub.s32 0, %v78
    %v80 = vrot.slane %v75, %v79
    %v84 = vunpack.c.l.b16 %v73
    %v85 = vunpack.c.l.b16 %v74
    %v86 = vpack.c.b16 %v85, %v84
    %vm88 = vcmask 130048
    %v90 = vsel %vm88, %v72, 0
    %92 = vmatprep.subr.bf16.mxu0 0
    %93 = vmatpush1.bf16.msra.mxu0 %v86
    %94 = vmatprep.subr.bf16.mxu0 0
    %95 = vmatpush1.bf16.msra.mxu0 0
    %96 = vmatprep.subr.bf16.mxu0 0
    %97 = vmatpush1.bf16.msra.mxu0 0
    %98 = vmatprep.subr.bf16.mxu0 0
    %99 = vmatpush1.bf16.msra.mxu0 0
    %100 = vmatprep.subr.bf16.mxu0 0
    %101 = vmatpush1.bf16.msra.mxu0 0
    %102 = vmatprep.subr.bf16.mxu0 0
    %103 = vmatpush1.bf16.msra.mxu0 0
    %104 = vmatprep.subr.bf16.mxu0 0
    %105 = vmatpush1.bf16.msra.mxu0 0
    %106 = vmatprep.subr.bf16.mxu0 0
    %107 = vmatpush1.bf16.msra.mxu0 0
    %108 = vmatprep.subr.bf16.mxu0 0
    %109 = vmatpush1.bf16.msra.mxu0 0
    %110 = vmatprep.subr.bf16.mxu0 0
    %111 = vmatpush1.bf16.msra.mxu0 0
    %112 = vmatprep.subr.bf16.mxu0 0
    %113 = vmatpush1.bf16.msra.mxu0 0
    %114 = vmatprep.subr.bf16.mxu0 0
    %115 = vmatpush1.bf16.msra.mxu0 0
    %116 = vmatprep.subr.bf16.mxu0 0
    %117 = vmatpush1.bf16.msra.mxu0 0
    %118 = vmatprep.subr.bf16.mxu0 0
    %119 = vmatpush1.bf16.msra.mxu0 0
    %120 = vmatprep.subr.bf16.mxu0 0
    %121 = vmatpush1.bf16.msra.mxu0 0
    %122 = vmatprep.subr.bf16.mxu0 0
    %123 = vmatpush1.bf16.msra.mxu0 0
    %124 = vmatprep.mubr.bf16.mxu0 0
    %125 = vmatmul.mubr.bf16.gmra.mrb[0].mxu0 %v90
    %v126 = vpop.f32.mrb[0].mxu0
    %v127 = vadd.f32 %v80, %v126
    %v128 = vpop.f32.mrb[0].mxu0
    %v129 = vpop.f32.mrb[0].mxu0
    %v130 = vadd.f32 %v80, %v129
    %v131 = vpop.f32.mrb[0].mxu0
    %132 = vdwg.mxu0
    %vm133 = vcmp.ge.f32.partialorder %v127, 0.0
    %vm134 = vcmp.ge.f32.partialorder %v130, 0.0
    %v135 = vmul.f32 %v127, 0.01
    %v136 = vmul.f32 %v130, 0.01
    %v137 = vsel %vm133, %v127, %v135
    %v138 = vsel %vm134, %v130, %v136
    %v139 = vpack.c.bf16 %v138, %v137
    %v140 = vld [vmem:[#allocation7] sm:$0xf]
    %v141 = vld [vmem:[#allocation7 + $0x4] sm:$0xf]
    %v142 = vld [vmem:[#allocation7 + $0x8] sm:$0xf]
    %v143 = vld [vmem:[#allocation7 + $0xc] sm:$0xf]
    %v144 = vld [vmem:[#allocation7 + $0x10] sm:$0xf]
    %v145 = vld [vmem:[#allocation7 + $0x14] sm:$0xf]
    %v146 = vld [vmem:[#allocation7 + $0x18] sm:$0xf]
    %v147 = vld [vmem:[#allocation7 + $0x1c] sm:$0xf]
    %v148 = vld [vmem:[#allocation7 + $0x20] sm:$0xf]
    %v149 = vld [vmem:[#allocation7 + $0x24] sm:$0xf]
    %v150 = vld [vmem:[#allocation7 + $0x28] sm:$0xf]
    %v151 = vld [vmem:[#allocation7 + $0x2c] sm:$0xf]
    %v152 = vld [vmem:[#allocation7 + $0x30] sm:$0xf]
    %v153 = vld [vmem:[#allocation7 + $0x34] sm:$0xf]
    %v154 = vld [vmem:[#allocation7 + $0x38] sm:$0xf]
    %v155 = vld [vmem:[#allocation7 + $0x3c] sm:$0xf]
    %v156 = vld [vmem:[%s4] sm:$0x1]
    %v158 = vlaneseq
    %v159 = vshrl.u32 %v158, 7
    %v160 = vsub.s32 0, %v159
    %v161 = vrot.slane %v156, %v160
    %v179 = vunpack.c.l.b16 %v140
    %v180 = vunpack.c.l.b16 %v141
    %v181 = vunpack.c.l.b16 %v142
    %v182 = vunpack.c.l.b16 %v143
    %v183 = vunpack.c.l.b16 %v144
    %v184 = vunpack.c.l.b16 %v145
    %v185 = vunpack.c.l.b16 %v146
    %v186 = vunpack.c.l.b16 %v147
    %v187 = vunpack.c.l.b16 %v148
    %v188 = vunpack.c.l.b16 %v149
    %v189 = vunpack.c.l.b16 %v150
    %v190 = vunpack.c.l.b16 %v151
    %v191 = vunpack.c.l.b16 %v152
    %v192 = vunpack.c.l.b16 %v153
    %v193 = vunpack.c.l.b16 %v154
    %v194 = vunpack.c.l.b16 %v155
    %v195 = vpack.c.b16 %v180, %v179
    %v196 = vpack.c.b16 %v182, %v181
    %v197 = vpack.c.b16 %v184, %v183
    %v198 = vpack.c.b16 %v186, %v185
    %v199 = vpack.c.b16 %v188, %v187
    %v200 = vpack.c.b16 %v190, %v189
    %v201 = vpack.c.b16 %v192, %v191
    %v202 = vpack.c.b16 %v194, %v193
    %211 = vmatprep.subr.bf16.mxu0 0
    %212 = vmatpush1.bf16.msra.mxu0 %v195
    %213 = vmatprep.subr.bf16.mxu0 0
    %214 = vmatpush1.bf16.msra.mxu0 %v196
    %215 = vmatprep.subr.bf16.mxu0 0
    %216 = vmatpush1.bf16.msra.mxu0 %v197
    %217 = vmatprep.subr.bf16.mxu0 0
    %218 = vmatpush1.bf16.msra.mxu0 %v198
    %219 = vmatprep.subr.bf16.mxu0 0
    %220 = vmatpush1.bf16.msra.mxu0 %v199
    %221 = vmatprep.subr.bf16.mxu0 0
    %222 = vmatpush1.bf16.msra.mxu0 %v200
    %223 = vmatprep.subr.bf16.mxu0 0
    %224 = vmatpush1.bf16.msra.mxu0 %v201
    %225 = vmatprep.subr.bf16.mxu0 0
    %226 = vmatpush1.bf16.msra.mxu0 %v202
    %227 = vmatprep.subr.bf16.mxu0 0
    %228 = vmatpush1.bf16.msra.mxu0 0
    %229 = vmatprep.subr.bf16.mxu0 0
    %230 = vmatpush1.bf16.msra.mxu0 0
    %231 = vmatprep.subr.bf16.mxu0 0
    %232 = vmatpush1.bf16.msra.mxu0 0
    %233 = vmatprep.subr.bf16.mxu0 0
    %234 = vmatpush1.bf16.msra.mxu0 0
    %235 = vmatprep.subr.bf16.mxu0 0
    %236 = vmatpush1.bf16.msra.mxu0 0
    %237 = vmatprep.subr.bf16.mxu0 0
    %238 = vmatpush1.bf16.msra.mxu0 0
    %239 = vmatprep.subr.bf16.mxu0 0
    %240 = vmatpush1.bf16.msra.mxu0 0
    %241 = vmatprep.subr.bf16.mxu0 0
    %242 = vmatpush1.bf16.msra.mxu0 0
    %243 = vmatprep.mubr.bf16.mxu0 0
    %244 = vmatmul.mubr.bf16.gmra.mrb[0].mxu0 %v139
    %v245 = vpop.f32.mrb[0].mxu0
    %v246 = vadd.f32 %v161, %v245
    %v247 = vpop.f32.mrb[0].mxu0
    %v248 = vpop.f32.mrb[0].mxu0
    %v249 = vadd.f32 %v161, %v248
    %v250 = vpop.f32.mrb[0].mxu0
    %251 = vdwg.mxu0
    %vm252 = vcmp.ge.f32.partialorder %v246, 0.0
    %vm253 = vcmp.ge.f32.partialorder %v249, 0.0
    %v254 = vmul.f32 %v246, 0.01
    %v255 = vmul.f32 %v249, 0.01
    %v256 = vsel %vm252, %v246, %v254
    %v257 = vsel %vm253, %v249, %v255
    %v258 = vld [vmem:[%s5] sm:$0x1]
    %v260 = vlaneseq
    %v261 = vshrl.u32 %v260, 7
    %v262 = vsub.s32 0, %v261
    %v263 = vrot.slane %v258, %v262
    %v265 = vmul.f32 %v256, %v263
    %v266 = vmul.f32 %v257, %v263
    %267 = vadd.xlane.f32.xlu0 %v265
    %v268 = vpop.xlane.xlu0 %267
    %269 = vadd.xlane.f32.xlu0 %v266
    %v270 = vpop.xlane.xlu0 %269
    %v271 = vld [vmem:[#allocation2] sm:$0x1]
    %v273 = vlaneseq
    %v274 = vshrl.u32 %v273, 7
    %v275 = vsub.s32 0, %v274
    %v276 = vrot.slane %v271, %v275
    %v278 = vadd.f32 %v268, %v276
    %v279 = vadd.f32 %v270, %v276
    %vm280 = vcmask 7168
    %281 = vst.msk [vmem:[#allocation8] sm:$0xff] %vm280, %v278
    %282 = vst.msk [vmem:[#allocation8 + $0x8] sm:$0xff] %vm280, %v279
    // Predicated region
    $region42: #{tpu_custom_call.1} parent=1 // pred_check
      _
    $region43: #{tpu_custom_call.1} parent=1 // pred_check_branch
      %284 = sbr.rel (0) target = $region45
    $region44: #{tpu_custom_call.1} parent=1 // pred_region
      // Predicated region
      $region46: #{tpu_custom_call.1} parent=44 // pred_check
        _
      $region47: #{tpu_custom_call.1} parent=44 // pred_check_branch
        %286 = sbr.rel (0) target = $region49
      $region48: #{tpu_custom_call.1} parent=44 // pred_region
        // Predicated region
        $region50: #{tpu_custom_call.1} parent=48 // pred_check
          _
        $region51: #{tpu_custom_call.1} parent=48 // pred_check_branch
          %288 = sbr.rel (0) target = $region53
        $region52: #{tpu_custom_call.1} parent=48 // pred_region
          // Predicated region
          $region65: #{tpu_custom_call.1} parent=52 // pred_check
            _
          $region66: #{tpu_custom_call.1} parent=52 // pred_check_branch
            %303 = sbr.rel (0) target = $region68
          $region67: #{tpu_custom_call.1} parent=52 // pred_region
            loop: start=0, step=1, limit=1
            $region69: #{tpu_custom_call.1} parent=67 // loop_pre_header
              _
            $region70: #{tpu_custom_call.1} parent=67 // loop_header
              %s305 = sphi 0, %s309
              %p306 = scmp.ge.s32.totalorder %s305, 1
              %s310 = sphi [#allocation8], [#allocation8]
              %s311 = sphi %s7, %s7
            $region71: #{tpu_custom_call.1} parent=67 // loop_header_branch
              %308 = sbr.rel (%p306) target = $region75
            $region72: #{tpu_custom_call.1} parent=67 // loop_body
              %v312 = vld [vmem:[%s310] sm:$0xff]
              %313 = vst [vmem:[%s311] sm:$0xff] %v312
            $region73: #{tpu_custom_call.1} parent=67 // loop_footer
              %s309 = sadd.s32 1, %s305
            $region74: #{tpu_custom_call.1} parent=67 // loop_footer_branch
              %304 = sbr.rel target = $region70
            $region75: #{tpu_custom_call.1} parent=67 // loop_exit
              _
          $region68: #{tpu_custom_call.1} parent=52 // pred_fallthru
            _
          // Predicated region
          $region76: #{tpu_custom_call.1} parent=52 // pred_check
            _
          $region77: #{tpu_custom_call.1} parent=52 // pred_check_branch
            %315 = sbr.rel target = $region79
          $region78: #{tpu_custom_call.1} parent=52 // pred_region
            _
          $region79: #{tpu_custom_call.1} parent=52 // pred_fallthru
            _
        $region53: #{tpu_custom_call.1} parent=48 // pred_fallthru
          _
        // Predicated region
        $region54: #{tpu_custom_call.1} parent=48 // pred_check
          _
        $region55: #{tpu_custom_call.1} parent=48 // pred_check_branch
          %290 = sbr.rel target = $region57
        $region56: #{tpu_custom_call.1} parent=48 // pred_region
          loop: start=0, step=1, limit=1
          $region58: #{tpu_custom_call.1} parent=56 // loop_pre_header
            _
          $region59: #{tpu_custom_call.1} parent=56 // loop_header
            %s293 = sphi 0, %s297
            %p294 = scmp.ge.s32.totalorder %s293, 1
            %s298 = sphi [#allocation8], [#allocation8]
            %s299 = sphi %s7, %s7
          $region60: #{tpu_custom_call.1} parent=56 // loop_header_branch
            %296 = sbr.rel (%p294) target = $region64
          $region61: #{tpu_custom_call.1} parent=56 // loop_body
            %v300 = vld [vmem:[%s298] sm:$0xff]
            %301 = vst [vmem:[%s299] sm:$0xff] %v300
          $region62: #{tpu_custom_call.1} parent=56 // loop_footer
            %s297 = sadd.s32 1, %s293
          $region63: #{tpu_custom_call.1} parent=56 // loop_footer_branch
            %292 = sbr.rel target = $region59
          $region64: #{tpu_custom_call.1} parent=56 // loop_exit
            _
        $region57: #{tpu_custom_call.1} parent=48 // pred_fallthru
          _
      $region49: #{tpu_custom_call.1} parent=44 // pred_fallthru
        _
      %316 = vnop
    $region45: #{tpu_custom_call.1} parent=1 // pred_fallthru
      _
    // Predicated region
    $region80: #{tpu_custom_call.1} parent=1 // pred_check
      _
    $region81: #{tpu_custom_call.1} parent=1 // pred_check_branch
      %318 = sbr.rel (0) target = $region83
    $region82: #{tpu_custom_call.1} parent=1 // pred_region
      _
    $region83: #{tpu_custom_call.1} parent=1 // pred_fallthru
      _
    %319 = vsyncpa [#allocation4], 1
    %320 = vsyncpa [#allocation6], 1

</llo_original>
